<compile_context>
chip_gen: v6e
topology: v6e:2x2x1
jax: 0.10.0
libtpu: 0.0.40
codegen_flags: <defaults>
</compile_context>

<pallas_src>
import jax
import jax.numpy as jnp
from jax.experimental import pallas as pl
from jax.experimental.pallas import tpu as pltpu

EPS = 1e-5
# Explicit scoped-VMEM limit: safe on v5e/v6e (128 MiB physical) and within
# v7x's 64 MiB physical VMEM.  Tiles below are sized well under this even
# with double-buffering of the pipelined input/output blocks.
_VMEM_LIMIT_BYTES = 32 * 1024 * 1024


# --------------------------- kernels ---------------------------

def _bn_stats_kernel(x_ref, sum_ref, sumsq_ref):
    """Accumulate per-channel sum and sum-of-squares over the whole (B, T) grid."""
    @pl.when(jnp.logical_and(pl.program_id(0) == 0, pl.program_id(1) == 0))
    def _():
        sum_ref[...] = jnp.zeros_like(sum_ref)
        sumsq_ref[...] = jnp.zeros_like(sumsq_ref)

    x = x_ref[0].astype(jnp.float32)                          # (C, tT)
    sum_ref[...] += jnp.sum(x, axis=-1, keepdims=True)        # (C, 1)
    sumsq_ref[...] += jnp.sum(x * x, axis=-1, keepdims=True)  # (C, 1)


def _bn_apply_kernel(x_ref, scale_ref, shift_ref, out_ref):
    """out[b, c, t] = scale[b, c] * x[b, c, t] + shift[b, c].

    scale/shift already fold the BN normalization and the conditional
    gamma/beta, so the heavy pass is a single fused multiply-add per element.
    """
    x = x_ref[...].astype(jnp.float32)                        # (1, C, tT)
    out_ref[...] = (x * scale_ref[...] + shift_ref[...]).astype(out_ref.dtype)


# --------------------------- wrapper ---------------------------

def _pick_time_tile(T, max_tile):
    """Largest multiple of 128 that divides T and is <= max_tile; else full T.

    (BlockSpec last dim must be a multiple of 128 or equal the full extent.)
    """
    if T <= max_tile:
        return T
    cap = (max_tile // 128) * 128
    for cand in range(cap, 0, -128):
        if T % cand == 0:
            return cand
    return T  # fallback: single full-T block


def cbatchnorm1d(x, c, params, *, max_tile=2048):
    """Conditional batch norm.  x: (B, f_dim, T) NCL float32, c: (B, c_dim)."""
    B, C, T = x.shape
    n = float(B * T)
    tT = _pick_time_tile(T, max_tile)
    nT = T // tT

    # ---- pass 1: per-channel sum / sum-of-squares (single-pass moments) ----
    ssum, ssq = pl.pallas_call(
        _bn_stats_kernel,
        grid=(B, nT),
        in_specs=[pl.BlockSpec((1, C, tT), lambda b, t: (b, 0, t))],
        out_specs=[pl.BlockSpec((C, 1), lambda b, t: (0, 0)),
                   pl.BlockSpec((C, 1), lambda b, t: (0, 0))],
        out_shape=[jax.ShapeDtypeStruct((C, 1), jnp.float32),
                   jax.ShapeDtypeStruct((C, 1), jnp.float32)],
        compiler_params=pltpu.CompilerParams(
            dimension_semantics=("arbitrary", "arbitrary"),
            vmem_limit_bytes=_VMEM_LIMIT_BYTES),
        cost_estimate=pl.CostEstimate(
            flops=3 * B * C * T, transcendentals=0,
            bytes_accessed=4 * B * C * T + 8 * C),
    )(x)

    mean = ssum[:, 0] / n                                   # (C,)
    var = ssq[:, 0] / n - mean * mean                       # biased variance (train-mode BN)

    # ---- conditional gamma/beta: tiny (B, c_dim) @ (c_dim, C) matmuls, hoisted
    #      out of the kernel (they are T-invariant and MXU-degenerate). ----
    gamma = c.astype(jnp.float32) @ params["g_w"].T + params["g_b"]   # (B, C)
    beta = c.astype(jnp.float32) @ params["b_w"].T + params["b_b"]    # (B, C)

    inv_std = jax.lax.rsqrt(var + EPS)                      # (C,)
    scale = gamma * inv_std[None, :]                        # (B, C)
    shift = beta - scale * mean[None, :]                    # (B, C)

    # ---- pass 2: fused normalize + conditional affine, fully parallel grid ----
    out = pl.pallas_call(
        _bn_apply_kernel,
        grid=(B, nT),
        in_specs=[pl.BlockSpec((1, C, tT), lambda b, t: (b, 0, t)),
                  pl.BlockSpec((1, C, 1), lambda b, t: (b, 0, 0)),
                  pl.BlockSpec((1, C, 1), lambda b, t: (b, 0, 0))],
        out_specs=pl.BlockSpec((1, C, tT), lambda b, t: (b, 0, t)),
        out_shape=jax.ShapeDtypeStruct((B, C, T), x.dtype),
        compiler_params=pltpu.CompilerParams(
            dimension_semantics=("parallel", "parallel"),   # megacore sharding on v7x
            vmem_limit_bytes=_VMEM_LIMIT_BYTES),
        cost_estimate=pl.CostEstimate(
            flops=2 * B * C * T, transcendentals=0,
            bytes_accessed=8 * B * C * T),
    )(x, scale[:, :, None], shift[:, :, None])
    return out


# ---------------- pure-JAX reference (PyTorch semantics) ----------------

def reference_forward(x, c, p):
    gamma = c @ p["g_w"].T + p["g_b"]                       # conv_gamma(c): (B, C)
    beta = c @ p["b_w"].T + p["b_b"]                        # conv_beta(c):  (B, C)
    mean = jnp.mean(x, axis=(0, 2), keepdims=True)
    var = jnp.mean((x - mean) ** 2, axis=(0, 2), keepdims=True)   # biased
    net = (x - mean) / jnp.sqrt(var + EPS)
    return gamma[:, :, None] * net + beta[:, :, None]


def make_params(key, c_dim, f_dim):
    # PyTorch Conv1d(k=1) weight is (out, in, 1) -> stored here as (out, in).
    # Random values (instead of the module's zeros/ones init) so that the
    # gamma/beta path is actually exercised by the check.
    ks = jax.random.split(key, 4)
    nrm = lambda k, shape, s=0.1: s * jax.random.normal(k, shape, dtype=jnp.float32)
    return {
        "g_w": nrm(ks[0], (f_dim, c_dim)), "g_b": nrm(ks[1], (f_dim,)) + 1.0,
        "b_w": nrm(ks[2], (f_dim, c_dim)), "b_b": nrm(ks[3], (f_dim,)),
    }


if __name__ == "__main__":
    B, c_dim, f_dim, T = 2, 8, 16, 512

    key = jax.random.PRNGKey(0)
    kx, kc, kp = jax.random.split(key, 3)
    x = jax.random.normal(kx, (B, f_dim, T), dtype=jnp.float32)   # NCL, like PyTorch
    c = jax.random.normal(kc, (B, c_dim), dtype=jnp.float32)
    params = make_params(kp, c_dim, f_dim)

    fwd = jax.jit(cbatchnorm1d, static_argnames=("max_tile",))
    # max_tile=256 -> T is split into 2 lane-dense tiles, exercising the
    # cross-tile stats accumulation path.
    out = fwd(x, c, params, max_tile=256)
    out = jax.block_until_ready(out)

    ref = reference_forward(x, c, params)
    assert out.shape == (B, f_dim, T)
    assert jnp.allclose(out, ref, atol=1e-4, rtol=1e-4), "mismatch vs JAX reference"

    print("KERNEL_OK")
</pallas_src>

<mosaic_0001>
module attributes {stable_mosaic.version = 11 : i64} {
  func.func @_bn_stats_kernel(%arg0: i32, %arg1: i32, %arg2: memref<1x16x256xf32, #tpu.memory_space<vmem>>, %arg3: memref<16x1xf32, #tpu.memory_space<vmem>>, %arg4: memref<16x1xf32, #tpu.memory_space<vmem>>) attributes {dimension_semantics = [#tpu.dimension_semantics<arbitrary>, #tpu.dimension_semantics<arbitrary>], iteration_bounds = array<i64: 2, 2>, scalar_prefetch = 0 : i64, scratch_operands = 0 : i64, tpu.core_type = #tpu.core_type<tc>, window_params = [{transform_indices = @transform_0, window_bounds = array<i64: 1, 16, 256>}, {pipeline_mode = #tpu.pipeline_mode<synchronous>, transform_indices = @transform_1, window_bounds = array<i64: 16, 1>}, {pipeline_mode = #tpu.pipeline_mode<synchronous>, transform_indices = @transform_2, window_bounds = array<i64: 16, 1>}]} {
    %c0_i32 = arith.constant 0 : i32
    %0 = arith.cmpi eq, %arg0, %c0_i32 : i32
    %c0_i32_0 = arith.constant 0 : i32
    %1 = arith.cmpi eq, %arg1, %c0_i32_0 : i32
    %2 = arith.andi %0, %1 : i1
    %3 = arith.extui %2 : i1 to i32
    %c0_i32_1 = arith.constant 0 : i32
    %4 = arith.cmpi ne, %3, %c0_i32_1 : i32
    scf.if %4 {
      %cst_13 = arith.constant 0.000000e+00 : f32
      %18 = vector.broadcast %cst_13 : f32 to vector<16x1xf32>
      %c0_14 = arith.constant 0 : index
      %c0_15 = arith.constant 0 : index
      %19 = vector.load %arg3[%c0_14, %c0_15] : memref<16x1xf32, #tpu.memory_space<vmem>>, vector<16x1xf32>
      tpu.vector_store %arg3[%c0_14, %c0_15], %18 {strides = array<i32>} : memref<16x1xf32, #tpu.memory_space<vmem>>, vector<16x1xf32>,
      %cst_16 = arith.constant 0.000000e+00 : f32
      %20 = vector.broadcast %cst_16 : f32 to vector<16x1xf32>
      %c0_17 = arith.constant 0 : index
      %c0_18 = arith.constant 0 : index
      %21 = vector.load %arg4[%c0_17, %c0_18] : memref<16x1xf32, #tpu.memory_space<vmem>>, vector<16x1xf32>
      tpu.vector_store %arg4[%c0_17, %c0_18], %20 {strides = array<i32>} : memref<16x1xf32, #tpu.memory_space<vmem>>, vector<16x1xf32>,
    } else {
    }
    %c0 = arith.constant 0 : index
    %c0_2 = arith.constant 0 : index
    %c0_3 = arith.constant 0 : index
    %5 = vector.load %arg2[%c0, %c0_2, %c0_3] : memref<1x16x256xf32, #tpu.memory_space<vmem>>, vector<1x16x256xf32>
    %6 = vector.shape_cast %5 : vector<1x16x256xf32> to vector<16x256xf32>
    %c0_4 = arith.constant 0 : index
    %c0_5 = arith.constant 0 : index
    %7 = vector.load %arg3[%c0_4, %c0_5] : memref<16x1xf32, #tpu.memory_space<vmem>>, vector<16x1xf32>
    %cst = arith.constant dense<0.000000e+00> : vector<16xf32>
    %8 = vector.multi_reduction <add>, %6, %cst [1] : vector<16x256xf32> to vector<16xf32>
    %9 = vector.shape_cast %8 : vector<16xf32> to vector<16x1xf32>
    %10 = arith.addf %7, %9 : vector<16x1xf32>
    %c0_6 = arith.constant 0 : index
    %c0_7 = arith.constant 0 : index
    %11 = vector.load %arg3[%c0_6, %c0_7] : memref<16x1xf32, #tpu.memory_space<vmem>>, vector<16x1xf32>
    tpu.vector_store %arg3[%c0_6, %c0_7], %10 {strides = array<i32>} : memref<16x1xf32, #tpu.memory_space<vmem>>, vector<16x1xf32>,
    %c0_8 = arith.constant 0 : index
    %c0_9 = arith.constant 0 : index
    %12 = vector.load %arg4[%c0_8, %c0_9] : memref<16x1xf32, #tpu.memory_space<vmem>>, vector<16x1xf32>
    %13 = arith.mulf %6, %6 : vector<16x256xf32>
    %cst_10 = arith.constant dense<0.000000e+00> : vector<16xf32>
    %14 = vector.multi_reduction <add>, %13, %cst_10 [1] : vector<16x256xf32> to vector<16xf32>
    %15 = vector.shape_cast %14 : vector<16xf32> to vector<16x1xf32>
    %16 = arith.addf %12, %15 : vector<16x1xf32>
    %c0_11 = arith.constant 0 : index
    %c0_12 = arith.constant 0 : index
    %17 = vector.load %arg4[%c0_11, %c0_12] : memref<16x1xf32, #tpu.memory_space<vmem>>, vector<16x1xf32>
    tpu.vector_store %arg4[%c0_11, %c0_12], %16 {strides = array<i32>} : memref<16x1xf32, #tpu.memory_space<vmem>>, vector<16x1xf32>,
    return
  }
  func.func @transform_0(%arg0: i32, %arg1: i32) -> (i32, i32, i32) {
    %c0_i32 = arith.constant 0 : i32
    %c0_i32_0 = arith.constant 0 : i32
    return %arg0, %c0_i32, %arg1 : i32, i32, i32
  }
  func.func @transform_1(%arg0: i32, %arg1: i32) -> (i32, i32) {
    %c0_i32 = arith.constant 0 : i32
    %c0_i32_0 = arith.constant 0 : i32
    %c0_i32_1 = arith.constant 0 : i32
    return %c0_i32, %c0_i32_0 : i32, i32
  }
  func.func @transform_2(%arg0: i32, %arg1: i32) -> (i32, i32) {
    %c0_i32 = arith.constant 0 : i32
    %c0_i32_0 = arith.constant 0 : i32
    %c0_i32_1 = arith.constant 0 : i32
    return %c0_i32, %c0_i32_0 : i32, i32
  }
}

module attributes {stable_mosaic.version = 11 : i64} {
  func.func @_bn_apply_kernel(%arg0: i32, %arg1: i32, %arg2: memref<1x16x256xf32, #tpu.memory_space<vmem>>, %arg3: memref<1x16x1xf32, #tpu.memory_space<vmem>>, %arg4: memref<1x16x1xf32, #tpu.memory_space<vmem>>, %arg5: memref<1x16x256xf32, #tpu.memory_space<vmem>>) attributes {dimension_semantics = [#tpu.dimension_semantics<parallel>, #tpu.dimension_semantics<parallel>], iteration_bounds = array<i64: 2, 2>, scalar_prefetch = 0 : i64, scratch_operands = 0 : i64, tpu.core_type = #tpu.core_type<tc>, window_params = [{transform_indices = @transform_0, window_bounds = array<i64: 1, 16, 256>}, {transform_indices = @transform_1, window_bounds = array<i64: 1, 16, 1>}, {transform_indices = @transform_2, window_bounds = array<i64: 1, 16, 1>}, {transform_indices = @transform_3, window_bounds = array<i64: 1, 16, 256>}]} {
    %c0 = arith.constant 0 : index
    %c0_0 = arith.constant 0 : index
    %c0_1 = arith.constant 0 : index
    %0 = vector.load %arg2[%c0, %c0_0, %c0_1] : memref<1x16x256xf32, #tpu.memory_space<vmem>>, vector<1x16x256xf32>
    %c0_2 = arith.constant 0 : index
    %c0_3 = arith.constant 0 : index
    %c0_4 = arith.constant 0 : index
    %1 = vector.load %arg3[%c0_2, %c0_3, %c0_4] : memref<1x16x1xf32, #tpu.memory_space<vmem>>, vector<1x16x1xf32>
    %2 = vector.broadcast %1 : vector<1x16x1xf32> to vector<1x16x256xf32>
    %3 = arith.mulf %0, %2 : vector<1x16x256xf32>
    %c0_5 = arith.constant 0 : index
    %c0_6 = arith.constant 0 : index
    %c0_7 = arith.constant 0 : index
    %4 = vector.load %arg4[%c0_5, %c0_6, %c0_7] : memref<1x16x1xf32, #tpu.memory_space<vmem>>, vector<1x16x1xf32>
    %5 = vector.broadcast %4 : vector<1x16x1xf32> to vector<1x16x256xf32>
    %6 = arith.addf %3, %5 : vector<1x16x256xf32>
    %c0_8 = arith.constant 0 : index
    %c0_9 = arith.constant 0 : index
    %c0_10 = arith.constant 0 : index
    %7 = vector.load %arg5[%c0_8, %c0_9, %c0_10] : memref<1x16x256xf32, #tpu.memory_space<vmem>>, vector<1x16x256xf32>
    tpu.vector_store %arg5[%c0_8, %c0_9, %c0_10], %6 {strides = array<i32>} : memref<1x16x256xf32, #tpu.memory_space<vmem>>, vector<1x16x256xf32>,
    return
  }
  func.func @transform_0(%arg0: i32, %arg1: i32) -> (i32, i32, i32) {
    %c0_i32 = arith.constant 0 : i32
    %c0_i32_0 = arith.constant 0 : i32
    return %arg0, %c0_i32, %arg1 : i32, i32, i32
  }
  func.func @transform_1(%arg0: i32, %arg1: i32) -> (i32, i32, i32) {
    %c0_i32 = arith.constant 0 : i32
    %c0_i32_0 = arith.constant 0 : i32
    %c0_i32_1 = arith.constant 0 : i32
    return %arg0, %c0_i32, %c0_i32_0 : i32, i32, i32
  }
  func.func @transform_2(%arg0: i32, %arg1: i32) -> (i32, i32, i32) {
    %c0_i32 = arith.constant 0 : i32
    %c0_i32_0 = arith.constant 0 : i32
    %c0_i32_1 = arith.constant 0 : i32
    return %arg0, %c0_i32, %c0_i32_0 : i32, i32, i32
  }
  func.func @transform_3(%arg0: i32, %arg1: i32) -> (i32, i32, i32) {
    %c0_i32 = arith.constant 0 : i32
    %c0_i32_0 = arith.constant 0 : i32
    return %arg0, %c0_i32, %arg1 : i32, i32, i32
  }
}

</mosaic_0001>

<llo_original>
// kernel: cbatchnorm1d.3
$region0: #{cbatchnorm1d.3}
  #allocation0 [shape = 'u32[]', space=smem, size = 0x4, offset = 0x4, fixed_abs, tag = 'smem constant byte address 0x4 - core index']
  #allocation1 [shape = 'u32[144,128]{1,0:T(1,128)}', space=vmem, size = 0x12000, scoped, tag = 'internal scratch']
  %s0 = inlined_call_operand.vmem [shape: f32[2,16,512], index: 0, kind: input, shape index: {}]
  %s1 = inlined_call_operand.vmem [shape: f32[2,16,1], index: 1, kind: input, shape index: {}]
  %s2 = inlined_call_operand.vmem [shape: f32[2,16,1], index: 2, kind: input, shape index: {}]
  %s3 = inlined_call_operand.hbm [shape: f32[2,16,512], index: 3, kind: output, shape index: {}]
  %s4 = sld [smem:[#allocation0]]
  $region68: #{cbatchnorm1d.3} parent=0
    _
  %s6 = ssub.s32 1, %s4
  %s7 = scalar_select 0, %s6, %s4
  $region1: #{cbatchnorm1d.3} parent=0
    #allocation2 [shape = 'u8[32768]{0}', space=vmem, size = 0x8000, scoped, tag = 'input window, operand 0']
    #allocation3 [shape = 'u8[32768]{0}', space=vmem, size = 0x8000, scoped, tag = 'output window, operand 0']
    #allocation4 [shape = 's32[2]{0}', space=sflag, size = 0x8, scoped, tag = 'scoped memory for cbatchnorm1d.3']
    %8 = vsyncpa [#allocation4], 0
    %s9 = scalar_lea.sflag [#allocation4], 1
    %10 = vsyncpa %s9, 0
    loop: start=0, step=1, limit=6
    $region2: #{cbatchnorm1d.3} parent=1 // loop_pre_header
      _
    $region3: #{cbatchnorm1d.3} parent=1 // loop_header
      %s12 = sphi 0, %s16
      %p13 = scmp.ge.s32.totalorder %s12, 6
      %s19 = sphi 0, %s31
      %s20 = sphi 0, %s27
      %s21 = sphi 0, %s19
      %s22 = sphi 0, %s20
      %s23 = sphi 0, %s21
      %s24 = sphi 0, %s22
      %s36 = sphi 0, %s38
      %s39 = sphi 0, %s36
      %s40 = sphi 0, %s39
      %s56 = sphi 0, %s40
      %s62 = sphi 0, %s64
      %s65 = sphi 0, %s62
      %s66 = sphi 0, %s65
      %s82 = sphi 0, %s66
      %s88 = sphi 0, %s90
      %s91 = sphi 0, %s88
      %s92 = sphi 0, %s91
      %s108 = sphi 0, %s92
      %s116 = sphi 0, %s118
      %s119 = sphi 0, %s116
      %s120 = sphi 0, %s119
      %s136 = sphi 0, %s120
    $region4: #{cbatchnorm1d.3} parent=1 // loop_header_branch
      %15 = sbr.rel (%p13) target = $region8
    $region5: #{cbatchnorm1d.3} parent=1 // loop_body
      %s17 = ssub.s32 %s12, 1
      %s18 = ssub.s32 %s12, 2
      %s25 = sadd.s32 1, %s20
      %p26 = scmp.ge.s32.totalorder %s25, 2
      %s27 = scalar_select %p26, 0, %s25
      %s28 = sadd.s32 1, %s19
      %s29 = scalar_select %p26, %s28, %s19
      %p30 = scmp.ge.s32.totalorder %s29, 2
      %s31 = scalar_select %p30, 0, %s29
      %s32 = ssub.s32 %s19, %s31
      %s33 = ssub.s32 %s20, %s27
      %s34 = sor.u32 %s32, %s33
      %p35 = scmp.eq.s32.totalorder %s34, 0
      %s37 = sadd.s32 %s36, 1
      %s38 = scalar_select %p35, %s36, %s37
      %p41 = pneg %p35
      %p42 = scmp.eq.s32.totalorder %s12, 3
      %p43 = por %p41, %p42
      %p44 = scmp.ne.s32.totalorder %s36, %s39
      %p45 = scmp.eq.s32.totalorder %s12, 0
      %p46 = por %p44, %p45
      %p47 = scmp.ne.s32.totalorder %s36, %s39
      %p48 = scmp.eq.s32.totalorder %s17, 3
      %p49 = por %p47, %p48
      %p50 = scmp.ne.s32.totalorder %s39, %s40
      %p51 = scmp.eq.s32.totalorder %s17, 0
      %p52 = por %p50, %p51
      %p53 = scmp.ne.s32.totalorder %s39, %s40
      %p54 = scmp.eq.s32.totalorder %s18, 3
      %p55 = por %p53, %p54
      %p57 = scmp.ne.s32.totalorder %s40, %s56
      %p58 = scmp.eq.s32.totalorder %s18, 0
      %p59 = por %p57, %p58
      %s60 = ssub.s32 %s19, %s31
      %p61 = scmp.eq.s32.totalorder %s60, 0
      %s63 = sadd.s32 %s62, 1
      %s64 = scalar_select %p61, %s62, %s63
      %p67 = pneg %p61
      %p68 = scmp.eq.s32.totalorder %s12, 3
      %p69 = por %p67, %p68
      %p70 = scmp.ne.s32.totalorder %s62, %s65
      %p71 = scmp.eq.s32.totalorder %s12, 0
      %p72 = por %p70, %p71
      %p73 = scmp.ne.s32.totalorder %s62, %s65
      %p74 = scmp.eq.s32.totalorder %s17, 3
      %p75 = por %p73, %p74
      %p76 = scmp.ne.s32.totalorder %s65, %s66
      %p77 = scmp.eq.s32.totalorder %s17, 0
      %p78 = por %p76, %p77
      %p79 = scmp.ne.s32.totalorder %s65, %s66
      %p80 = scmp.eq.s32.totalorder %s18, 3
      %p81 = por %p79, %p80
      %p83 = scmp.ne.s32.totalorder %s66, %s82
      %p84 = scmp.eq.s32.totalorder %s18, 0
      %p85 = por %p83, %p84
      %s86 = ssub.s32 %s19, %s31
      %p87 = scmp.eq.s32.totalorder %s86, 0
      %s89 = sadd.s32 %s88, 1
      %s90 = scalar_select %p87, %s88, %s89
      %p93 = pneg %p87
      %p94 = scmp.eq.s32.totalorder %s12, 3
      %p95 = por %p93, %p94
      %p96 = scmp.ne.s32.totalorder %s88, %s91
      %p97 = scmp.eq.s32.totalorder %s12, 0
      %p98 = por %p96, %p97
      %p99 = scmp.ne.s32.totalorder %s88, %s91
      %p100 = scmp.eq.s32.totalorder %s17, 3
      %p101 = por %p99, %p100
      %p102 = scmp.ne.s32.totalorder %s91, %s92
      %p103 = scmp.eq.s32.totalorder %s17, 0
      %p104 = por %p102, %p103
      %p105 = scmp.ne.s32.totalorder %s91, %s92
      %p106 = scmp.eq.s32.totalorder %s18, 3
      %p107 = por %p105, %p106
      %p109 = scmp.ne.s32.totalorder %s92, %s108
      %p110 = scmp.eq.s32.totalorder %s18, 0
      %p111 = por %p109, %p110
      %s112 = ssub.s32 %s19, %s31
      %s113 = ssub.s32 %s20, %s27
      %s114 = sor.u32 %s112, %s113
      %p115 = scmp.eq.s32.totalorder %s114, 0
      %s117 = sadd.s32 %s116, 1
      %s118 = scalar_select %p115, %s116, %s117
      %p121 = pneg %p115
      %p122 = scmp.eq.s32.totalorder %s12, 3
      %p123 = por %p121, %p122
      %p124 = scmp.ne.s32.totalorder %s116, %s119
      %p125 = scmp.eq.s32.totalorder %s12, 0
      %p126 = por %p124, %p125
      %p127 = scmp.ne.s32.totalorder %s116, %s119
      %p128 = scmp.eq.s32.totalorder %s17, 3
      %p129 = por %p127, %p128
      %p130 = scmp.ne.s32.totalorder %s119, %s120
      %p131 = scmp.eq.s32.totalorder %s17, 0
      %p132 = por %p130, %p131
      %p133 = scmp.ne.s32.totalorder %s119, %s120
      %p134 = scmp.eq.s32.totalorder %s18, 3
      %p135 = por %p133, %p134
      %p137 = scmp.ne.s32.totalorder %s120, %s136
      %p138 = scmp.eq.s32.totalorder %s18, 0
      %p139 = por %p137, %p138
      %p140 = scmp.le.s32.totalorder 1, %s12
      %p141 = scmp.lt.s32.totalorder %s12, 5
      %p142 = pnand %p140, %p141
      %p143 = pneg %p142
      // Predicated region
      $region9: #{cbatchnorm1d.3} parent=5 // pred_check
        _
      $region10: #{cbatchnorm1d.3} parent=5 // pred_check_branch
        %145 = sbr.rel (%p142) target = $region12
      $region11: #{cbatchnorm1d.3} parent=5 // pred_region
        %s146 = ssub.s32 %s12, 1
      $region12: #{cbatchnorm1d.3} parent=5 // pred_fallthru
        _
      %p147 = scmp.lt.s32.totalorder %s12, 4
      // Predicated region
      $region13: #{cbatchnorm1d.3} parent=5 // pred_check
        %p148 = pneg %p147
      $region14: #{cbatchnorm1d.3} parent=5 // pred_check_branch
        %150 = sbr.rel (%p148) target = $region16
      $region15: #{cbatchnorm1d.3} parent=5 // pred_region
        // Predicated region
        $region17: #{cbatchnorm1d.3} parent=15 // pred_check
          %p151 = pneg %p46
        $region18: #{cbatchnorm1d.3} parent=15 // pred_check_branch
          %153 = sbr.rel (%p151) target = $region20
        $region19: #{cbatchnorm1d.3} parent=15 // pred_region
          %s154 = sand.u32 %s36, 1
          %s155 = sand.u32 %s36, 1
          %s156 = smul.addr %s155, 32
          %s157 = scalar_lea.vmem [#allocation2], %s156
          %s158 = smul.u32 2, %s20
          %s159 = smul.addr %s19, 8
          %s160 = sadd.s32 %s158, %s159
          %s161 = smul.addr %s160, 8
          %s162 = scalar_lea.vmem %s0, %s161
          // Predicated region
          $region21: #{cbatchnorm1d.3} parent=19 // pred_check
            _
          $region22: #{cbatchnorm1d.3} parent=19 // pred_check_branch
            %164 = sbr.rel (0) target = $region24
          $region23: #{cbatchnorm1d.3} parent=19 // pred_region
            // Predicated region
            $region25: #{cbatchnorm1d.3} parent=23 // pred_check
              _
            $region26: #{cbatchnorm1d.3} parent=23 // pred_check_branch
              %166 = sbr.rel (0) target = $region28
            $region27: #{cbatchnorm1d.3} parent=23 // pred_region
              loop: start=0, step=1, limit=1
              $region29: #{cbatchnorm1d.3} parent=27 // loop_pre_header
                _
              $region30: #{cbatchnorm1d.3} parent=27 // loop_header
                %s168 = sphi 0, %s172
                %p169 = scmp.ge.s32.totalorder %s168, 1
                %s173 = sphi %s162, %s162
                %s174 = sphi %s157, %s157
              $region31: #{cbatchnorm1d.3} parent=27 // loop_header_branch
                %171 = sbr.rel (%p169) target = $region35
              $region32: #{cbatchnorm1d.3} parent=27 // loop_body
                %v175 = vld [vmem:[%s173] sm:$0xff]
                %176 = vst [vmem:[%s174] sm:$0xff] %v175
                %v177 = vld [vmem:[%s173 + $0x8] sm:$0xff]
                %178 = vst [vmem:[%s174 + $0x8] sm:$0xff] %v177
                %v179 = vld [vmem:[%s173 + $0x20] sm:$0xff]
                %180 = vst [vmem:[%s174 + $0x10] sm:$0xff] %v179
                %v181 = vld [vmem:[%s173 + $0x28] sm:$0xff]
                %182 = vst [vmem:[%s174 + $0x18] sm:$0xff] %v181
              $region33: #{cbatchnorm1d.3} parent=27 // loop_footer
                %s172 = sadd.s32 1, %s168
              $region34: #{cbatchnorm1d.3} parent=27 // loop_footer_branch
                %167 = sbr.rel target = $region30
              $region35: #{cbatchnorm1d.3} parent=27 // loop_exit
                _
            $region28: #{cbatchnorm1d.3} parent=23 // pred_fallthru
              _
            // Predicated region
            $region36: #{cbatchnorm1d.3} parent=23 // pred_check
              _
            $region37: #{cbatchnorm1d.3} parent=23 // pred_check_branch
              %184 = sbr.rel target = $region39
            $region38: #{cbatchnorm1d.3} parent=23 // pred_region
              _
            $region39: #{cbatchnorm1d.3} parent=23 // pred_fallthru
              _
          $region24: #{cbatchnorm1d.3} parent=19 // pred_fallthru
            _
          %185 = vnop
        $region20: #{cbatchnorm1d.3} parent=15 // pred_fallthru
          _
        // Predicated region
        $region40: #{cbatchnorm1d.3} parent=15 // pred_check
          %p186 = pneg %p72
        $region41: #{cbatchnorm1d.3} parent=15 // pred_check_branch
          %188 = sbr.rel (%p186) target = $region43
        $region42: #{cbatchnorm1d.3} parent=15 // pred_region
          %p189 = scmp.lt.s32.totalorder %s19, 1
          %s190 = scalar_select %p189, %s19, 1
          %s191 = smul.addr %s190, 2
          %s192 = smul.addr %s191, 8
          %s193 = scalar_lea.vmem %s1, %s192
        $region43: #{cbatchnorm1d.3} parent=15 // pred_fallthru
          _
        // Predicated region
        $region44: #{cbatchnorm1d.3} parent=15 // pred_check
          %p194 = pneg %p98
        $region45: #{cbatchnorm1d.3} parent=15 // pred_check_branch
          %196 = sbr.rel (%p194) target = $region47
        $region46: #{cbatchnorm1d.3} parent=15 // pred_region
          %p197 = scmp.lt.s32.totalorder %s19, 1
          %s198 = scalar_select %p197, %s19, 1
          %s199 = smul.addr %s198, 2
          %s200 = smul.addr %s199, 8
          %s201 = scalar_lea.vmem %s2, %s200
        $region47: #{cbatchnorm1d.3} parent=15 // pred_fallthru
          _
      $region16: #{cbatchnorm1d.3} parent=5 // pred_fallthru
        _
      %p202 = scmp.le.s32.totalorder 1, %s12
      %p203 = scmp.lt.s32.totalorder %s12, 5
      %p204 = pnand %p202, %p203
      %p205 = pneg %p204
      // Predicated region
      $region48: #{cbatchnorm1d.3} parent=5 // pred_check
        _
      $region49: #{cbatchnorm1d.3} parent=5 // pred_check_branch
        %207 = sbr.rel (%p204) target = $region51
      $region50: #{cbatchnorm1d.3} parent=5 // pred_region
        %s208 = ssub.s32 %s12, 1
        %s209 = sand.u32 %s39, 1
        %s210 = sand.u32 %s39, 1
        %s211 = smul.addr %s210, 32
        %s212 = scalar_lea.vmem [#allocation2], %s211
        // Predicated region
        $region52: #{cbatchnorm1d.3} parent=50 // pred_check
          %p213 = pneg %p52
        $region53: #{cbatchnorm1d.3} parent=50 // pred_check_branch
          %215 = sbr.rel (%p213) target = $region55
        $region54: #{cbatchnorm1d.3} parent=50 // pred_region
          _
        $region55: #{cbatchnorm1d.3} parent=50 // pred_fallthru
          _
        %s216 = sand.u32 %s39, 1
        %s217 = sand.u32 %s39, 1
        %s218 = smul.addr %s217, 32
        %s219 = scalar_lea.vmem [#allocation2], %s218
        %p220 = pneg %p52
        %p221 = pneg %p49
        %p222 = scmp.lt.s32.totalorder %s21, 1
        %s223 = scalar_select %p222, %s21, 1
        %s224 = smul.addr %s223, 2
        %s225 = smul.addr %s224, 8
        %s226 = scalar_lea.vmem %s1, %s225
        %p227 = pneg %p78
        %p228 = pneg %p75
        %p229 = scmp.lt.s32.totalorder %s21, 1
        %s230 = scalar_select %p229, %s21, 1
        %s231 = smul.addr %s230, 2
        %s232 = smul.addr %s231, 8
        %s233 = scalar_lea.vmem %s2, %s232
        %p234 = pneg %p104
        %p235 = pneg %p101
        %p236 = pneg %p132
        %p237 = pneg %p129
        %s238 = sand.u32 %s119, 1
        %s239 = scalar_lea.sflag [#allocation4], %s238
        %s240 = sand.u32 %s119, 1
        %s241 = smul.addr %s240, 32
        %s242 = scalar_lea.vmem [#allocation3], %s241
        %s243 = smul.u32 2, %s22
        %p244 = scmp.lt.s32.totalorder %s21, 1
        %s245 = scalar_select %p244, %s21, 1
        %s246 = smul.addr %s245, 2
        %s247 = smul.addr %s246, 8
        %s248 = scalar_lea.vmem %s1, %s247
        %p249 = scmp.lt.s32.totalorder %s21, 1
        %s250 = scalar_select %p249, %s21, 1
        %s251 = smul.addr %s250, 2
        %s252 = smul.addr %s251, 8
        %s253 = scalar_lea.vmem %s2, %s252
        %s254 = smul.u32 2, %s22
        %v255 = vld [vmem:[%s212] sm:$0xff]
        %v256 = vld [vmem:[%s212 + $0x8] sm:$0xff]
        %v257 = vld [vmem:[%s212 + $0x10] sm:$0xff]
        %v258 = vld [vmem:[%s212 + $0x18] sm:$0xff]
        %v259 = vld [vmem:[%s248] sm:$0xff]
        %v260 = vld [vmem:[%s248 + $0x8] sm:$0xff]
        %262 = vset.pattern.permute.xlu0 0
        %263 = vperm.xlu0 %262, %v259
        %v264 = vpop.permute.xlu0 %263
        %267 = vset.pattern.permute.xlu0 0
        %268 = vperm.xlu0 %267, %v260
        %v269 = vpop.permute.xlu0 %268
        %v271 = vmul.f32 %v255, %v264
        %v272 = vmul.f32 %v256, %v264
        %v273 = vmul.f32 %v257, %v269
        %v274 = vmul.f32 %v258, %v269
        %v275 = vld [vmem:[%s253] sm:$0xff]
        %v276 = vld [vmem:[%s253 + $0x8] sm:$0xff]
        %278 = vset.pattern.permute.xlu0 0
        %279 = vperm.xlu0 %278, %v275
        %v280 = vpop.permute.xlu0 %279
        %283 = vset.pattern.permute.xlu0 0
        %284 = vperm.xlu0 %283, %v276
        %v285 = vpop.permute.xlu0 %284
        %v287 = vadd.f32 %v271, %v280
        %v288 = vadd.f32 %v272, %v280
        %v289 = vadd.f32 %v273, %v285
        %v290 = vadd.f32 %v274, %v285
        %291 = vst [vmem:[%s242] sm:$0xff] %v287
        %292 = vst [vmem:[%s242 + $0x8] sm:$0xff] %v288
        %293 = vst [vmem:[%s242 + $0x10] sm:$0xff] %v289
        %294 = vst [vmem:[%s242 + $0x18] sm:$0xff] %v290
        %s295 = sand.u32 %s119, 1
        %s296 = scalar_lea.sflag [#allocation4], %s295
        %s297 = sand.u32 %s119, 1
        %s298 = smul.addr %s297, 32
        %s299 = scalar_lea.vmem [#allocation3], %s298
        // Predicated region
        $region56: #{cbatchnorm1d.3} parent=50 // pred_check
          %p300 = pneg %p129
        $region57: #{cbatchnorm1d.3} parent=50 // pred_check_branch
          %302 = sbr.rel (%p300) target = $region59
        $region58: #{cbatchnorm1d.3} parent=50 // pred_region
          %s303 = smul.u32 2, %s22
          %s305 = ssub.s32 512, 512
          %306 = vsyncadd %s296, %s305
          %s307 = smul.addr %s21, 8
          %s308 = sadd.s32 %s303, %s307
          %s309 = smul.addr %s308, 128
          %s310 = scalar_lea.hbm %s3, %s309
          %s311 = sshll.u32 %s299, 4
          %s312 = int_to_ptr.vmem [resolvable:$true] %s311
          %317 = dma.vmem_to_hbm [thread:$0]  %s312, 512, %s310, %s296, 256, 512, 16
        $region59: #{cbatchnorm1d.3} parent=50 // pred_fallthru
          _
      $region51: #{cbatchnorm1d.3} parent=5 // pred_fallthru
        _
      %p318 = scmp.le.s32.totalorder 2, %s12
      // Predicated region
      $region60: #{cbatchnorm1d.3} parent=5 // pred_check
        %p319 = pneg %p318
      $region61: #{cbatchnorm1d.3} parent=5 // pred_check_branch
        %321 = sbr.rel (%p319) target = $region63
      $region62: #{cbatchnorm1d.3} parent=5 // pred_region
        %s322 = ssub.s32 %s12, 2
        // Predicated region
        $region64: #{cbatchnorm1d.3} parent=62 // pred_check
          %p323 = pneg %p135
        $region65: #{cbatchnorm1d.3} parent=62 // pred_check_branch
          %325 = sbr.rel (%p323) target = $region67
        $region66: #{cbatchnorm1d.3} parent=62 // pred_region
          %s326 = sand.u32 %s120, 1
          %s327 = scalar_lea.sflag [#allocation4], %s326
          %s328 = sand.u32 %s120, 1
          %s329 = smul.addr %s328, 32
          %s330 = scalar_lea.vmem [#allocation3], %s329
          %331 = dma.done %s327, 512
        $region67: #{cbatchnorm1d.3} parent=62 // pred_fallthru
          _
      $region63: #{cbatchnorm1d.3} parent=5 // pred_fallthru
        _
    $region6: #{cbatchnorm1d.3} parent=1 // loop_footer
      %s16 = sadd.s32 1, %s12
    $region7: #{cbatchnorm1d.3} parent=1 // loop_footer_branch
      %11 = sbr.rel target = $region3
    $region8: #{cbatchnorm1d.3} parent=1 // loop_exit
      _
    %332 = vsyncpa [#allocation4], 1
    %s333 = scalar_lea.sflag [#allocation4], 1
    %334 = vsyncpa %s333, 1

// kernel: cbatchnorm1d.2
$region0: #{cbatchnorm1d.2}
  #allocation0 [shape = 'u32[]', space=smem, size = 0x4, offset = 0x4, fixed_abs, tag = 'smem constant byte address 0x4 - core index']
  #allocation1 [shape = 'u32[144,128]{1,0:T(1,128)}', space=vmem, size = 0x12000, scoped, tag = 'internal scratch']
  %s0 = inlined_call_operand.hbm [shape: f32[2,16,512], index: 0, kind: input, shape index: {}]
  %s1 = inlined_call_operand.vmem [shape: f32[16,1], index: 1, kind: output, shape index: {0}]
  %s2 = inlined_call_operand.vmem [shape: f32[16,1], index: 2, kind: output, shape index: {1}]
  %3 = xla_tuple %s1, %s2
  %s4 = sld [smem:[#allocation0]]
  $region53: #{cbatchnorm1d.2} parent=0
    _
  %s6 = ssub.s32 1, %s4
  %s7 = scalar_select 0, %s6, %s4
  $region1: #{cbatchnorm1d.2} parent=0
    #allocation2 [shape = 'u8[32768]{0}', space=vmem, size = 0x8000, scoped, tag = 'input window, operand 0']
    #allocation3 [shape = 's32[2]{0}', space=sflag, size = 0x8, scoped, tag = 'scoped memory for cbatchnorm1d.2']
    %8 = vsyncpa [#allocation3], 0
    %s9 = scalar_lea.sflag [#allocation3], 1
    %10 = vsyncpa %s9, 0
    loop: start=0, step=1, limit=6
    $region2: #{cbatchnorm1d.2} parent=1 // loop_pre_header
      _
    $region3: #{cbatchnorm1d.2} parent=1 // loop_header
      %s12 = sphi 0, %s16
      %p13 = scmp.ge.s32.totalorder %s12, 6
      %s19 = sphi 0, %s31
      %s20 = sphi 0, %s27
      %s21 = sphi 0, %s19
      %s22 = sphi 0, %s20
      %s23 = sphi 0, %s21
      %s24 = sphi 0, %s22
      %s36 = sphi 0, %s38
      %s39 = sphi 0, %s36
      %s40 = sphi 0, %s39
      %s56 = sphi 0, %s40
      %s60 = sphi 0, %s60
      %s62 = sphi 0, %s60
      %s63 = sphi 0, %s62
      %s77 = sphi 0, %s63
      %s81 = sphi 0, %s81
      %s83 = sphi 0, %s81
      %s84 = sphi 0, %s83
      %s98 = sphi 0, %s84
    $region4: #{cbatchnorm1d.2} parent=1 // loop_header_branch
      %15 = sbr.rel (%p13) target = $region8
    $region5: #{cbatchnorm1d.2} parent=1 // loop_body
      %s17 = ssub.s32 %s12, 1
      %s18 = ssub.s32 %s12, 2
      %s25 = sadd.s32 1, %s20
      %p26 = scmp.ge.s32.totalorder %s25, 2
      %s27 = scalar_select %p26, 0, %s25
      %s28 = sadd.s32 1, %s19
      %s29 = scalar_select %p26, %s28, %s19
      %p30 = scmp.ge.s32.totalorder %s29, 2
      %s31 = scalar_select %p30, 0, %s29
      %s32 = ssub.s32 %s19, %s31
      %s33 = ssub.s32 %s20, %s27
      %s34 = sor.u32 %s32, %s33
      %p35 = scmp.eq.s32.totalorder %s34, 0
      %s37 = sadd.s32 %s36, 1
      %s38 = scalar_select %p35, %s36, %s37
      %p41 = pneg %p35
      %p42 = scmp.eq.s32.totalorder %s12, 3
      %p43 = por %p41, %p42
      %p44 = scmp.ne.s32.totalorder %s36, %s39
      %p45 = scmp.eq.s32.totalorder %s12, 0
      %p46 = por %p44, %p45
      %p47 = scmp.ne.s32.totalorder %s36, %s39
      %p48 = scmp.eq.s32.totalorder %s17, 3
      %p49 = por %p47, %p48
      %p50 = scmp.ne.s32.totalorder %s39, %s40
      %p51 = scmp.eq.s32.totalorder %s17, 0
      %p52 = por %p50, %p51
      %p53 = scmp.ne.s32.totalorder %s39, %s40
      %p54 = scmp.eq.s32.totalorder %s18, 3
      %p55 = por %p53, %p54
      %p57 = scmp.ne.s32.totalorder %s40, %s56
      %p58 = scmp.eq.s32.totalorder %s18, 0
      %p59 = por %p57, %p58
      %s61 = sadd.s32 %s60, 1
      %p64 = scmp.eq.s32.totalorder %s12, 3
      %p65 = scmp.ne.s32.totalorder %s60, %s62
      %p66 = scmp.eq.s32.totalorder %s12, 0
      %p67 = por %p65, %p66
      %p68 = scmp.ne.s32.totalorder %s60, %s62
      %p69 = scmp.eq.s32.totalorder %s17, 3
      %p70 = por %p68, %p69
      %p71 = scmp.ne.s32.totalorder %s62, %s63
      %p72 = scmp.eq.s32.totalorder %s17, 0
      %p73 = por %p71, %p72
      %p74 = scmp.ne.s32.totalorder %s62, %s63
      %p75 = scmp.eq.s32.totalorder %s18, 3
      %p76 = por %p74, %p75
      %p78 = scmp.ne.s32.totalorder %s63, %s77
      %p79 = scmp.eq.s32.totalorder %s18, 0
      %p80 = por %p78, %p79
      %s82 = sadd.s32 %s81, 1
      %p85 = scmp.eq.s32.totalorder %s12, 3
      %p86 = scmp.ne.s32.totalorder %s81, %s83
      %p87 = scmp.eq.s32.totalorder %s12, 0
      %p88 = por %p86, %p87
      %p89 = scmp.ne.s32.totalorder %s81, %s83
      %p90 = scmp.eq.s32.totalorder %s17, 3
      %p91 = por %p89, %p90
      %p92 = scmp.ne.s32.totalorder %s83, %s84
      %p93 = scmp.eq.s32.totalorder %s17, 0
      %p94 = por %p92, %p93
      %p95 = scmp.ne.s32.totalorder %s83, %s84
      %p96 = scmp.eq.s32.totalorder %s18, 3
      %p97 = por %p95, %p96
      %p99 = scmp.ne.s32.totalorder %s84, %s98
      %p100 = scmp.eq.s32.totalorder %s18, 0
      %p101 = por %p99, %p100
      %p102 = scmp.le.s32.totalorder 1, %s12
      %p103 = scmp.lt.s32.totalorder %s12, 5
      %p104 = pnand %p102, %p103
      %p105 = pneg %p104
      // Predicated region
      $region9: #{cbatchnorm1d.2} parent=5 // pred_check
        _
      $region10: #{cbatchnorm1d.2} parent=5 // pred_check_branch
        %107 = sbr.rel (%p104) target = $region12
      $region11: #{cbatchnorm1d.2} parent=5 // pred_region
        %s108 = ssub.s32 %s12, 1
      $region12: #{cbatchnorm1d.2} parent=5 // pred_fallthru
        _
      %p109 = scmp.lt.s32.totalorder %s12, 4
      // Predicated region
      $region13: #{cbatchnorm1d.2} parent=5 // pred_check
        %p110 = pneg %p109
      $region14: #{cbatchnorm1d.2} parent=5 // pred_check_branch
        %112 = sbr.rel (%p110) target = $region16
      $region15: #{cbatchnorm1d.2} parent=5 // pred_region
        // Predicated region
        $region17: #{cbatchnorm1d.2} parent=15 // pred_check
          %p113 = pneg %p46
        $region18: #{cbatchnorm1d.2} parent=15 // pred_check_branch
          %115 = sbr.rel (%p113) target = $region20
        $region19: #{cbatchnorm1d.2} parent=15 // pred_region
          %s116 = sand.u32 %s36, 1
          %s117 = scalar_lea.sflag [#allocation3], %s116
          %s118 = sand.u32 %s36, 1
          %s119 = smul.addr %s118, 32
          %s120 = scalar_lea.vmem [#allocation2], %s119
          %s121 = smul.u32 2, %s20
          %s123 = ssub.s32 512, 512
          %124 = vsyncadd %s117, %s123
          %s125 = smul.addr %s19, 8
          %s126 = sadd.s32 %s121, %s125
          %s127 = smul.addr %s126, 128
          %s128 = scalar_lea.hbm %s0, %s127
          %s129 = sshll.u32 %s120, 4
          %s130 = int_to_ptr.vmem [resolvable:$true] %s129
          %135 = dma.hbm_to_vmem [thread:$0]  %s128, 512, %s130, %s117, 512, 256, 16
        $region20: #{cbatchnorm1d.2} parent=15 // pred_fallthru
          _
      $region16: #{cbatchnorm1d.2} parent=5 // pred_fallthru
        _
      %p136 = scmp.le.s32.totalorder 1, %s12
      %p137 = scmp.lt.s32.totalorder %s12, 5
      %p138 = pnand %p136, %p137
      %p139 = pneg %p138
      // Predicated region
      $region21: #{cbatchnorm1d.2} parent=5 // pred_check
        _
      $region22: #{cbatchnorm1d.2} parent=5 // pred_check_branch
        %141 = sbr.rel (%p138) target = $region24
      $region23: #{cbatchnorm1d.2} parent=5 // pred_region
        %s142 = ssub.s32 %s12, 1
        %s143 = sand.u32 %s39, 1
        %s144 = scalar_lea.sflag [#allocation3], %s143
        %s145 = sand.u32 %s39, 1
        %s146 = smul.addr %s145, 32
        %s147 = scalar_lea.vmem [#allocation2], %s146
        // Predicated region
        $region25: #{cbatchnorm1d.2} parent=23 // pred_check
          %p148 = pneg %p52
        $region26: #{cbatchnorm1d.2} parent=23 // pred_check_branch
          %150 = sbr.rel (%p148) target = $region28
        $region27: #{cbatchnorm1d.2} parent=23 // pred_region
          %151 = dma.done %s144, 512
        $region28: #{cbatchnorm1d.2} parent=23 // pred_fallthru
          _
        %s152 = sand.u32 %s39, 1
        %s153 = scalar_lea.sflag [#allocation3], %s152
        %s154 = sand.u32 %s39, 1
        %s155 = smul.addr %s154, 32
        %s156 = scalar_lea.vmem [#allocation2], %s155
        %p157 = pneg %p52
        %p158 = pneg %p49
        %p159 = pneg %p73
        %p160 = pneg %p70
        %p161 = pneg %p94
        %p162 = pneg %p91
        %s163 = smul.u32 2, %s22
        %p164 = scmp.eq.s32.totalorder %s21, 0
        %p165 = scmp.eq.s32.totalorder %s22, 0
        %p166 = pnand %p164, %p165
        %p167 = pneg %p166
        // Predicated region
        $region29: #{cbatchnorm1d.2} parent=23 // pred_check
          _
        $region30: #{cbatchnorm1d.2} parent=23 // pred_check_branch
          %169 = sbr.rel (%p166) target = $region32
        $region31: #{cbatchnorm1d.2} parent=23 // pred_region
          %vm170 = vcmask 7168
          %171 = vst.msk [vmem:[%s1] sm:$0xff] %vm170, 0.0
          %172 = vst.msk [vmem:[%s1 + $0x8] sm:$0xff] %vm170, 0.0
          %173 = vst.msk [vmem:[%s2] sm:$0xff] %vm170, 0.0
          %174 = vst.msk [vmem:[%s2 + $0x8] sm:$0xff] %vm170, 0.0
        $region32: #{cbatchnorm1d.2} parent=23 // pred_fallthru
          _
        %v175 = vld [vmem:[%s147] sm:$0xff]
        %v176 = vld [vmem:[%s147 + $0x8] sm:$0xff]
        %v177 = vld [vmem:[%s147 + $0x10] sm:$0xff]
        %v178 = vld [vmem:[%s147 + $0x18] sm:$0xff]
        %v179 = vld [vmem:[%s1] sm:$0xff]
        %v180 = vld [vmem:[%s1 + $0x8] sm:$0xff]
        %v181 = vadd.f32 %v175, %v176
        %182 = vadd.xlane.f32.xlu0 %v181
        %v183 = vpop.xlane.xlu0 %182
        %v184 = vadd.f32 %v177, %v178
        %185 = vadd.xlane.f32.xlu0 %v184
        %v186 = vpop.xlane.xlu0 %185
        %v187 = vadd.f32 %v179, %v183
        %v188 = vadd.f32 %v180, %v186
        %vm189 = vcmask 7168
        %190 = vst.msk [vmem:[%s1] sm:$0xff] %vm189, %v187
        %191 = vst.msk [vmem:[%s1 + $0x8] sm:$0xff] %vm189, %v188
        %v192 = vld [vmem:[%s2] sm:$0xff]
        %v193 = vld [vmem:[%s2 + $0x8] sm:$0xff]
        %v194 = vmul.f32 %v175, %v175
        %v195 = vmul.f32 %v176, %v176
        %v196 = vmul.f32 %v177, %v177
        %v197 = vmul.f32 %v178, %v178
        %v198 = vadd.f32 %v194, %v195
        %199 = vadd.xlane.f32.xlu0 %v198
        %v200 = vpop.xlane.xlu0 %199
        %v201 = vadd.f32 %v196, %v197
        %202 = vadd.xlane.f32.xlu0 %v201
        %v203 = vpop.xlane.xlu0 %202
        %v204 = vadd.f32 %v192, %v200
        %v205 = vadd.f32 %v193, %v203
        %206 = vst.msk [vmem:[%s2] sm:$0xff] %vm189, %v204
        %207 = vst.msk [vmem:[%s2 + $0x8] sm:$0xff] %vm189, %v205
        // Predicated region
        $region33: #{cbatchnorm1d.2} parent=23 // pred_check
          %p208 = pneg %p70
        $region34: #{cbatchnorm1d.2} parent=23 // pred_check_branch
          %210 = sbr.rel (%p208) target = $region36
        $region35: #{cbatchnorm1d.2} parent=23 // pred_region
          _
        $region36: #{cbatchnorm1d.2} parent=23 // pred_fallthru
          _
        // Predicated region
        $region37: #{cbatchnorm1d.2} parent=23 // pred_check
          %p211 = pneg %p91
        $region38: #{cbatchnorm1d.2} parent=23 // pred_check_branch
          %213 = sbr.rel (%p211) target = $region40
        $region39: #{cbatchnorm1d.2} parent=23 // pred_region
          _
        $region40: #{cbatchnorm1d.2} parent=23 // pred_fallthru
          _
        // Predicated region
        $region41: #{cbatchnorm1d.2} parent=23 // pred_check
          %p214 = pneg %p70
        $region42: #{cbatchnorm1d.2} parent=23 // pred_check_branch
          %216 = sbr.rel (%p214) target = $region44
        $region43: #{cbatchnorm1d.2} parent=23 // pred_region
          _
        $region44: #{cbatchnorm1d.2} parent=23 // pred_fallthru
          _
        // Predicated region
        $region45: #{cbatchnorm1d.2} parent=23 // pred_check
          %p217 = pneg %p91
        $region46: #{cbatchnorm1d.2} parent=23 // pred_check_branch
          %219 = sbr.rel (%p217) target = $region48
        $region47: #{cbatchnorm1d.2} parent=23 // pred_region
          _
        $region48: #{cbatchnorm1d.2} parent=23 // pred_fallthru
          _
      $region24: #{cbatchnorm1d.2} parent=5 // pred_fallthru
        _
      %p220 = scmp.le.s32.totalorder 2, %s12
      // Predicated region
      $region49: #{cbatchnorm1d.2} parent=5 // pred_check
        %p221 = pneg %p220
      $region50: #{cbatchnorm1d.2} parent=5 // pred_check_branch
        %223 = sbr.rel (%p221) target = $region52
      $region51: #{cbatchnorm1d.2} parent=5 // pred_region
        %s224 = ssub.s32 %s12, 2
      $region52: #{cbatchnorm1d.2} parent=5 // pred_fallthru
        _
    $region6: #{cbatchnorm1d.2} parent=1 // loop_footer
      %s16 = sadd.s32 1, %s12
    $region7: #{cbatchnorm1d.2} parent=1 // loop_footer_branch
      %11 = sbr.rel target = $region3
    $region8: #{cbatchnorm1d.2} parent=1 // loop_exit
      _
    %225 = vsyncpa [#allocation3], 1
    %s226 = scalar_lea.sflag [#allocation3], 1
    %227 = vsyncpa %s226, 1

</llo_original>
